<compile_context>
chip_gen: v7x
topology: tpu7x:2x2x1
jax: 0.10.0
libtpu: 0.0.40
codegen_flags: <defaults>
</compile_context>

<pallas_src>
import functools

import jax
import jax.numpy as jnp
from jax.experimental import pallas as pl
from jax.experimental.pallas import tpu as pltpu

LANE = 128


def _mse_sum_kernel(real_ref, fake_ref, out_ref, acc_ref, *,
                    blocks_per_chunk, block_rows, total_rows, mask_tail):
    """Accumulate sum((fake - real)^2) over row-blocks; reduce once at the end."""
    i = pl.program_id(1)

    @pl.when(i == 0)
    def _init():
        acc_ref[...] = jnp.zeros_like(acc_ref)

    d = fake_ref[...].astype(jnp.float32) - real_ref[...].astype(jnp.float32)
    sq = d * d

    if mask_tail:
        # Last block of the slab is only partially backed by real data; the
        # remainder of the VMEM buffer is unspecified -> mask by global row.
        c = pl.program_id(0)
        g = c * blocks_per_chunk + i                      # global block index
        row = jax.lax.broadcasted_iota(jnp.int32, sq.shape, 0)
        valid = (g * block_rows + row) < total_rows
        sq = jnp.where(valid, sq, 0.0)

    acc_ref[...] += sq                                    # pure VPU, no XLU

    @pl.when(i == pl.num_programs(1) - 1)
    def _finalize():
        out_ref[...] = jnp.sum(acc_ref[...], keepdims=True)


def _to_slab(x):
    """Flatten to a lane-dense (rows, 128) slab. No copy when size % 128 == 0."""
    flat = x.reshape(-1)
    rows = pl.cdiv(flat.size, LANE)
    if flat.size != rows * LANE:
        # Rare ragged case (size not a multiple of 128): pad only the tail to
        # the next multiple of 128.  Zero pad contributes 0 to the sum.
        flat = jnp.pad(flat, (0, rows * LANE - flat.size))
    return flat.reshape(rows, LANE)


@functools.partial(jax.jit, static_argnames=("row_tile",))
def diffusion_loss(real_B, fake_B, row_tile=2048):
    """loss_diff = mean((fake_B - real_B)**2), computed in a Pallas TPU kernel."""
    assert real_B.shape == fake_B.shape
    n_true = real_B.size

    real_s = _to_slab(real_B)
    fake_s = _to_slab(fake_B)
    rows = real_s.shape[0]

    # Block rows: full extent for small inputs (always legal), otherwise
    # row_tile (a multiple of 8, so the (8, 128) constraint is satisfied).
    bt = rows if rows <= row_tile else row_tile
    nblk = pl.cdiv(rows, bt)

    # Split the reduction across 2 TensorCores (v7x) when the block count
    # divides evenly; on single-TC chips this just runs sequentially.
    nchunks = 2 if (nblk >= 2 and nblk % 2 == 0) else 1
    blocks_per_chunk = nblk // nchunks
    mask_tail = (rows % bt) != 0

    kernel = functools.partial(
        _mse_sum_kernel,
        blocks_per_chunk=blocks_per_chunk,
        block_rows=bt,
        total_rows=rows,
        mask_tail=mask_tail,
    )

    in_map = lambda c, i: (c * blocks_per_chunk + i, 0)

    partials = pl.pallas_call(
        kernel,
        out_shape=jax.ShapeDtypeStruct((nchunks, 1), jnp.float32),
        grid_spec=pltpu.PrefetchScalarGridSpec(
            num_scalar_prefetch=0,
            grid=(nchunks, blocks_per_chunk),
            in_specs=[
                pl.BlockSpec((bt, LANE), in_map),
                pl.BlockSpec((bt, LANE), in_map),
            ],
            out_specs=pl.BlockSpec((1, 1), lambda c, i: (c, 0)),
            scratch_shapes=[pltpu.VMEM((bt, LANE), jnp.float32)],
        ),
        compiler_params=pltpu.CompilerParams(
            dimension_semantics=("parallel", "arbitrary"),
        ),
    )(real_s, fake_s)

    return (jnp.sum(partials) / n_true).astype(jnp.float32)


if __name__ == "__main__":
    key = jax.random.PRNGKey(0)
    k1, k2, k3, k4, k5, k6 = jax.random.split(key, 6)

    # 1) Small NCHW tensors, consistent with the PyTorch forward(real_B, fake_B).
    real_B = jax.random.normal(k1, (2, 4, 16, 16), dtype=jnp.float32)
    fake_B = jax.random.normal(k2, (2, 4, 16, 16), dtype=jnp.float32)
    loss = jax.block_until_ready(diffusion_loss(real_B, fake_B))
    ref = jnp.mean((fake_B - real_B) ** 2)
    assert jnp.allclose(loss, ref, rtol=1e-6, atol=1e-6), (loss, ref)

    # 2) Ragged size (not a multiple of 128) -> exercises the tail-pad path.
    r2 = jax.random.normal(k3, (3, 3, 7, 5), dtype=jnp.float32)
    f2 = jax.random.normal(k4, (3, 3, 7, 5), dtype=jnp.float32)
    loss2 = jax.block_until_ready(diffusion_loss(r2, f2))
    ref2 = jnp.mean((f2 - r2) ** 2)
    assert jnp.allclose(loss2, ref2, rtol=1e-6, atol=1e-6), (loss2, ref2)

    # 3) Multi-block grid with a partial last block + 2-chunk split
    #    (small row_tile only to exercise that code path on tiny data).
    r3 = jax.random.normal(k5, (2, 3, 40, 40), dtype=jnp.bfloat16)
    f3 = jax.random.normal(k6, (2, 3, 40, 40), dtype=jnp.bfloat16)
    loss3 = jax.block_until_ready(diffusion_loss(r3, f3, row_tile=8))
    ref3 = jnp.mean((f3.astype(jnp.float32) - r3.astype(jnp.float32)) ** 2)
    assert jnp.allclose(loss3, ref3, rtol=1e-5, atol=1e-5), (loss3, ref3)

    print("KERNEL_OK")
</pallas_src>

<mosaic_0001>
module attributes {stable_mosaic.version = 11 : i64} {
  func.func @_mse_sum_kernel(%arg0: i32, %arg1: i32, %arg2: memref<16x128xf32, #tpu.memory_space<vmem>>, %arg3: memref<16x128xf32, #tpu.memory_space<vmem>>, %arg4: memref<1x1xf32, #tpu.memory_space<vmem>>, %arg5: memref<16x128xf32, #tpu.memory_space<vmem>>) attributes {dimension_semantics = [#tpu.dimension_semantics<parallel>, #tpu.dimension_semantics<arbitrary>], iteration_bounds = array<i64: 1, 1>, scalar_prefetch = 0 : i64, scratch_operands = 1 : i64, tpu.core_type = #tpu.core_type<tc>, window_params = [{transform_indices = @transform_0, window_bounds = array<i64: 16, 128>}, {transform_indices = @transform_1, window_bounds = array<i64: 16, 128>}, {transform_indices = @transform_2, window_bounds = array<i64: 1, 1>}]} {
    %c0_i32 = arith.constant 0 : i32
    %0 = arith.cmpi eq, %arg1, %c0_i32 : i32
    %1 = arith.extui %0 : i1 to i32
    %c0_i32_0 = arith.constant 0 : i32
    %2 = arith.cmpi ne, %1, %c0_i32_0 : i32
    scf.if %2 {
      %cst = arith.constant 0.000000e+00 : f32
      %13 = vector.broadcast %cst : f32 to vector<16x128xf32>
      %c0_10 = arith.constant 0 : index
      %c0_11 = arith.constant 0 : index
      %14 = vector.load %arg5[%c0_10, %c0_11] : memref<16x128xf32, #tpu.memory_space<vmem>>, vector<16x128xf32>
      tpu.vector_store %arg5[%c0_10, %c0_11], %13 {strides = array<i32>} : memref<16x128xf32, #tpu.memory_space<vmem>>, vector<16x128xf32>,
    } else {
    }
    %c0 = arith.constant 0 : index
    %c0_1 = arith.constant 0 : index
    %3 = vector.load %arg3[%c0, %c0_1] : memref<16x128xf32, #tpu.memory_space<vmem>>, vector<16x128xf32>
    %c0_2 = arith.constant 0 : index
    %c0_3 = arith.constant 0 : index
    %4 = vector.load %arg2[%c0_2, %c0_3] : memref<16x128xf32, #tpu.memory_space<vmem>>, vector<16x128xf32>
    %5 = arith.subf %3, %4 : vector<16x128xf32>
    %6 = arith.mulf %5, %5 : vector<16x128xf32>
    %c0_4 = arith.constant 0 : index
    %c0_5 = arith.constant 0 : index
    %7 = vector.load %arg5[%c0_4, %c0_5] : memref<16x128xf32, #tpu.memory_space<vmem>>, vector<16x128xf32>
    %8 = arith.addf %7, %6 : vector<16x128xf32>
    %c0_6 = arith.constant 0 : index
    %c0_7 = arith.constant 0 : index
    %9 = vector.load %arg5[%c0_6, %c0_7] : memref<16x128xf32, #tpu.memory_space<vmem>>, vector<16x128xf32>
    tpu.vector_store %arg5[%c0_6, %c0_7], %8 {strides = array<i32>} : memref<16x128xf32, #tpu.memory_space<vmem>>, vector<16x128xf32>,
    %c0_i32_8 = arith.constant 0 : i32
    %10 = arith.cmpi eq, %arg1, %c0_i32_8 : i32
    %11 = arith.extui %10 : i1 to i32
    %c0_i32_9 = arith.constant 0 : i32
    %12 = arith.cmpi ne, %11, %c0_i32_9 : i32
    scf.if %12 {
      %c0_10 = arith.constant 0 : index
      %c0_11 = arith.constant 0 : index
      %13 = vector.load %arg5[%c0_10, %c0_11] : memref<16x128xf32, #tpu.memory_space<vmem>>, vector<16x128xf32>
      %14 = vector.shape_cast %13 : vector<16x128xf32> to vector<1x16x128xf32>
      %cst = arith.constant dense<0.000000e+00> : vector<1xf32>
      %15 = vector.multi_reduction <add>, %14, %cst [1, 2] : vector<1x16x128xf32> to vector<1xf32>
      %16 = vector.shape_cast %15 : vector<1xf32> to vector<1x1x1xf32>
      %17 = vector.extract %16[0, 0, 0] : f32 from vector<1x1x1xf32>
      %18 = vector.broadcast %17 : f32 to vector<1x1xf32>
      %c0_12 = arith.constant 0 : index
      %c0_13 = arith.constant 0 : index
      %19 = vector.load %arg4[%c0_12, %c0_13] : memref<1x1xf32, #tpu.memory_space<vmem>>, vector<1x1xf32>
      tpu.vector_store %arg4[%c0_12, %c0_13], %18 {strides = array<i32>} : memref<1x1xf32, #tpu.memory_space<vmem>>, vector<1x1xf32>,
    } else {
    }
    return
  }
  func.func @transform_0(%arg0: i32, %arg1: i32) -> (i32, i32) {
    %c1_i32 = arith.constant 1 : i32
    %0 = arith.muli %arg0, %c1_i32 : i32
    %1 = arith.addi %0, %arg1 : i32
    %c0_i32 = arith.constant 0 : i32
    %c0_i32_0 = arith.constant 0 : i32
    return %1, %c0_i32 : i32, i32
  }
  func.func @transform_1(%arg0: i32, %arg1: i32) -> (i32, i32) {
    %c1_i32 = arith.constant 1 : i32
    %0 = arith.muli %arg0, %c1_i32 : i32
    %1 = arith.addi %0, %arg1 : i32
    %c0_i32 = arith.constant 0 : i32
    %c0_i32_0 = arith.constant 0 : i32
    return %1, %c0_i32 : i32, i32
  }
  func.func @transform_2(%arg0: i32, %arg1: i32) -> (i32, i32) {
    %c0_i32 = arith.constant 0 : i32
    %c0_i32_0 = arith.constant 0 : i32
    return %arg0, %c0_i32 : i32, i32
  }
}

</mosaic_0001>

<llo_original>
// kernel: diffusion_loss.1
$region0: #{diffusion_loss.1}
  #allocation0 [shape = 'u32[]', space=smem, size = 0x4, offset = 0x4, fixed_abs, tag = 'smem constant byte address 0x4 - core index']
  #allocation1 [shape = 'u32[144,128]{1,0:T(1,128)}', space=vmem, size = 0x12000, scoped, tag = 'internal scratch']
  #allocation2 [shape = 'f32[16,128]{1,0:T(8,128)}', space=vmem, size = 0x2000, scoped, tag = 'scratch operand']
  %s0 = inlined_call_operand.vmem [shape: f32[16,128], index: 0, kind: input, shape index: {}]
  %s1 = inlined_call_operand.vmem [shape: f32[16,128], index: 1, kind: input, shape index: {}]
  %s2 = inlined_call_operand.hbm [shape: f32[1,1], index: 2, kind: output, shape index: {}]
  %s3 = sld [smem:[#allocation0]]
  $region26: #{diffusion_loss.1} parent=0
    _
  %s5 = ssub.s32 1, %s3
  %s6 = scalar_select 0, %s5, %s3
  $region1: #{diffusion_loss.1} parent=0
    #allocation3 [shape = 'u8[512]{0}', space=vmem, size = 0x400, scoped, tag = 'output window, operand 0, single buffered']
    #allocation4 [shape = 's32[1]{0}', space=sflag, size = 0x4, scoped, tag = 'scoped memory for diffusion_loss.1']
    %7 = vsyncpa [#allocation4], 0
    // Predicated region
    $region2: #{diffusion_loss.1} parent=1 // pred_check
      _
    $region3: #{diffusion_loss.1} parent=1 // pred_check_branch
      %9 = sbr.rel (0) target = $region5
    $region4: #{diffusion_loss.1} parent=1 // pred_region
      %s10 = sadd.s32 0, 0
      %s11 = smul.u32 2, %s10
      %p12 = scmp.lt.s32.totalorder %s11, 1
      %s13 = scalar_select %p12, %s11, 1
      %s14 = smul.addr %s13, 8
      %s15 = scalar_lea.vmem %s0, %s14
      %s16 = sadd.s32 0, 0
      %s17 = smul.u32 2, %s16
    $region5: #{diffusion_loss.1} parent=1 // pred_fallthru
      _
    // Predicated region
    $region6: #{diffusion_loss.1} parent=1 // pred_check
      _
    $region7: #{diffusion_loss.1} parent=1 // pred_check_branch
      %19 = sbr.rel (0) target = $region9
    $region8: #{diffusion_loss.1} parent=1 // pred_region
      %s20 = sadd.s32 0, 0
      %s21 = smul.u32 2, %s20
      %p22 = scmp.lt.s32.totalorder %s21, 1
      %s23 = scalar_select %p22, %s21, 1
      %s24 = smul.addr %s23, 8
      %s25 = scalar_lea.vmem %s1, %s24
      %s26 = sadd.s32 0, 0
      %s27 = smul.u32 2, %s26
    $region9: #{diffusion_loss.1} parent=1 // pred_fallthru
      _
    %s28 = sadd.s32 0, 0
    %s29 = smul.u32 2, %s28
    %p30 = scmp.lt.s32.totalorder %s29, 1
    %s31 = scalar_select %p30, %s29, 1
    %s32 = smul.addr %s31, 8
    %s33 = scalar_lea.vmem %s0, %s32
    %s34 = sadd.s32 0, 0
    %s35 = smul.u32 2, %s34
    %p36 = scmp.lt.s32.totalorder %s35, 1
    %s37 = scalar_select %p36, %s35, 1
    %s38 = smul.addr %s37, 8
    %s39 = scalar_lea.vmem %s1, %s38
    %s40 = sadd.s32 0, 0
    %s41 = smul.u32 2, %s40
    %p42 = scmp.lt.s32.totalorder %s41, 1
    %s43 = scalar_select %p42, %s41, 1
    %s44 = smul.addr %s43, 8
    %s45 = scalar_lea.vmem %s0, %s44
    %s46 = sadd.s32 0, 0
    %s47 = smul.u32 2, %s46
    %s48 = sadd.s32 0, 0
    %s49 = smul.u32 2, %s48
    %p50 = scmp.lt.s32.totalorder %s49, 1
    %s51 = scalar_select %p50, %s49, 1
    %s52 = smul.addr %s51, 8
    %s53 = scalar_lea.vmem %s1, %s52
    %s54 = sadd.s32 0, 0
    %s55 = smul.u32 2, %s54
    %p56 = scmp.eq.s32.totalorder 0, 0
    // Predicated region
    $region10: #{diffusion_loss.1} parent=1 // pred_check
      %p57 = pneg %p56
    $region11: #{diffusion_loss.1} parent=1 // pred_check_branch
      %59 = sbr.rel (%p57) target = $region13
    $region12: #{diffusion_loss.1} parent=1 // pred_region
      %60 = vst [vmem:[#allocation2] sm:$0xff] 0.0
      %61 = vst [vmem:[#allocation2 + $0x8] sm:$0xff] 0.0
    $region13: #{diffusion_loss.1} parent=1 // pred_fallthru
      _
    %v62 = vld [vmem:[%s53] sm:$0xff]
    %v63 = vld [vmem:[%s53 + $0x8] sm:$0xff]
    %v64 = vld [vmem:[%s45] sm:$0xff]
    %v65 = vld [vmem:[%s45 + $0x8] sm:$0xff]
    %v66 = vsub.f32 %v62, %v64
    %v67 = vsub.f32 %v63, %v65
    %v68 = vmul.f32 %v66, %v66
    %v69 = vmul.f32 %v67, %v67
    %v70 = vld [vmem:[#allocation2] sm:$0xff]
    %v71 = vld [vmem:[#allocation2 + $0x8] sm:$0xff]
    %v72 = vadd.f32 %v70, %v68
    %v73 = vadd.f32 %v71, %v69
    %74 = vst [vmem:[#allocation2] sm:$0xff] %v72
    %75 = vst [vmem:[#allocation2 + $0x8] sm:$0xff] %v73
    // Predicated region
    $region14: #{diffusion_loss.1} parent=1 // pred_check
      %p76 = pneg %p56
    $region15: #{diffusion_loss.1} parent=1 // pred_check_branch
      %78 = sbr.rel (%p76) target = $region17
    $region16: #{diffusion_loss.1} parent=1 // pred_region
      %v79 = vld [vmem:[#allocation2] sm:$0xff]
      %v80 = vld [vmem:[#allocation2 + $0x8] sm:$0xff]
      %v81 = vadd.f32 %v79, %v80
      %82 = vadd.xlane.f32.xlu0 %v81
      %v83 = vpop.xlane.xlu0 %82
      %v84 = vrot.slane %v83, 4
      %v85 = vadd.f32 %v83, %v84
      %v86 = vrot.slane %v85, 2
      %v87 = vadd.f32 %v85, %v86
      %v88 = vrot.slane %v87, 1
      %v89 = vadd.f32 %v87, %v88
      %s90 = vtos %v89
      %v91 = vstv %s90
      %vm92 = vcmask 0
      %93 = vst.msk [vmem:[#allocation3] sm:$0x1] %vm92, %v91
    $region17: #{diffusion_loss.1} parent=1 // pred_fallthru
      _
    // Predicated region
    $region18: #{diffusion_loss.1} parent=1 // pred_check
      _
    $region19: #{diffusion_loss.1} parent=1 // pred_check_branch
      %95 = sbr.rel (0) target = $region21
    $region20: #{diffusion_loss.1} parent=1 // pred_region
      %s97 = ssub.s32 16, 16
      %98 = vsyncadd [#allocation4], %s97
      %s100 = sshll.u32 [#allocation3], 4
      %s101 = int_to_ptr.vmem [resolvable:$true] %s100
      %103 = dma.vmem_to_hbm [thread:$0]  %s101, 16, %s2, [#allocation4]
    $region21: #{diffusion_loss.1} parent=1 // pred_fallthru
      _
    // Predicated region
    $region22: #{diffusion_loss.1} parent=1 // pred_check
      _
    $region23: #{diffusion_loss.1} parent=1 // pred_check_branch
      %105 = sbr.rel (0) target = $region25
    $region24: #{diffusion_loss.1} parent=1 // pred_region
      %106 = dma.done [#allocation4], 16
    $region25: #{diffusion_loss.1} parent=1 // pred_fallthru
      _
    %107 = vsyncpa [#allocation4], 1

</llo_original>
